<compile_context>
chip_gen: v6e
topology: v6e:2x2x1
jax: 0.10.0
libtpu: 0.0.40
codegen_flags: <defaults>
</compile_context>

<pallas_src>
import functools
import math

import numpy as np
import jax
import jax.numpy as jnp
from jax.experimental import pallas as pl
from jax.experimental.pallas import tpu as pltpu


def _fft_kernel(x_ref, b_ref, y_ref):
    # [tm, 2N] @ [2N, 2N] -> [tm, 2N]; f32 accumulation on the MXU.
    y_ref[...] = jnp.dot(x_ref[...], b_ref[...],
                         preferred_element_type=jnp.float32)


@functools.lru_cache(maxsize=None)
def _fft_block_basis(n: int, norm) -> np.ndarray:
    """Real 2Nx2N forward-DFT block basis, built once on host at trace time.

    Forward FFT: W[n,k] = cos(2*pi*n*k/N) - j*sin(2*pi*n*k/N), so with
    planar [Xr | Xi] layout:
        Yr = Xr@C + Xi@S
        Yi = -Xr@S + Xi@C
    """
    if norm is None or norm == "backward":
        scale = 1.0
    elif norm == "ortho":
        scale = 1.0 / math.sqrt(n)
    elif norm == "forward":
        scale = 1.0 / n
    else:
        raise ValueError(f"unknown norm: {norm!r}")
    idx = np.arange(n, dtype=np.float64)
    ang = (2.0 * np.pi / n) * np.outer(idx, idx)
    c = np.cos(ang) * scale
    s = np.sin(ang) * scale
    b = np.empty((2 * n, 2 * n), dtype=np.float32)
    b[:n, :n] = c
    b[:n, n:] = -s
    b[n:, :n] = s
    b[n:, n:] = c
    return b


def _round_up(x: int, m: int) -> int:
    return -(-x // m) * m


@functools.partial(jax.jit, static_argnames=("n", "dim", "norm", "row_tile"))
def fft_block(x: jax.Array, n=None, dim: int = -1, norm=None, row_tile: int = 256):
    """Pallas implementation of FFTBlock.forward (complex64 out)."""
    x = jnp.asarray(x).astype(jnp.complex64)
    x = jnp.moveaxis(x, dim, -1)

    # torch.fft.fft n-semantics: truncate or zero-pad along the transform dim.
    in_len = x.shape[-1]
    if n is not None and n != in_len:
        if n < in_len:
            x = x[..., :n]
        else:
            pad = [(0, 0)] * (x.ndim - 1) + [(0, n - in_len)]
            x = jnp.pad(x, pad)
    N = x.shape[-1]
    batch_shape = x.shape[:-1]
    M = int(np.prod(batch_shape)) if batch_shape else 1
    two_n = 2 * N

    # Planar real|imag slab (M, 2N).  A complex64->f32 bitcast would make this
    # free, but lax.bitcast_convert_type rejects complex dtypes, so the slab is
    # built with a single concatenate (one XLA pass) instead.
    xr = jnp.real(x).reshape(M, N).astype(jnp.float32)
    xi = jnp.imag(x).reshape(M, N).astype(jnp.float32)
    x2 = jnp.concatenate([xr, xi], axis=-1)  # (M, 2N)

    # Row tile: big and 8-aligned (256 matches the 256x256 MXU on v6e/v7x;
    # 128 is native on v5e).  Pad rows so any batch product works.
    tm = max(8, _round_up(min(row_tile, M), 8))
    # v7x has 2 TensorCores: keep >= 2 grid steps when the batch is big enough
    # so the "parallel" row axis can be sharded across both cores.
    if M >= 512 and M // tm < 2:
        tm = _round_up((M + 1) // 2, 8)
    m_pad = _round_up(M, tm)
    if m_pad != M:
        x2 = jnp.pad(x2, ((0, m_pad - M), (0, 0)))

    basis = jnp.asarray(_fft_block_basis(N, norm))  # compile-time constant

    # VMEM budget: double-buffered (tm, 2N) in/out blocks + resident basis.
    # TODO(synk): for very large N on v7x (64 MiB VMEM), add a column-tile grid
    # axis and pipeline_mode=pl.Buffered(1) on the basis BlockSpec.
    vmem_bytes = 4 * two_n * (2 * 2 * tm + 2 * two_n) + (2 << 20)
    vmem_limit = int(min(max(vmem_bytes, 16 << 20), 48 << 20))

    grid_spec = pltpu.PrefetchScalarGridSpec(
        num_scalar_prefetch=0,
        grid=(m_pad // tm,),
        in_specs=[
            pl.BlockSpec((tm, two_n), lambda i: (i, 0)),      # activation rows
            pl.BlockSpec((two_n, two_n), lambda i: (0, 0)),   # basis (resident)
        ],
        out_specs=pl.BlockSpec((tm, two_n), lambda i: (i, 0)),
    )

    y2 = pl.pallas_call(
        _fft_kernel,
        out_shape=jax.ShapeDtypeStruct((m_pad, two_n), jnp.float32),
        grid_spec=grid_spec,
        compiler_params=pltpu.CompilerParams(
            dimension_semantics=("parallel",),
            vmem_limit_bytes=vmem_limit,
        ),
    )(x2, basis)

    y2 = y2[:M]
    yr = y2[:, :N].reshape(*batch_shape, N)
    yi = y2[:, N:].reshape(*batch_shape, N)
    y = jax.lax.complex(yr, yi)  # complex64
    return jnp.moveaxis(y, -1, dim)


if __name__ == "__main__":
    key = jax.random.PRNGKey(0)
    kr, ki = jax.random.split(key)
    B, C, H, W = 2, 4, 16, 16
    x = (
        jax.random.normal(kr, (B, C, H, W), dtype=jnp.float32)
        + 1j * jax.random.normal(ki, (B, C, H, W), dtype=jnp.float32)
    ).astype(jnp.complex64)

    y = fft_block(x)  # n=None, dim=-1, norm=None (FFTBlock defaults)
    y = jax.block_until_ready(y)

    # Correctness check against the reference forward FFT.
    y_ref = jnp.fft.fft(x, axis=-1).astype(jnp.complex64)
    assert y.shape == x.shape and y.dtype == jnp.complex64
    assert jnp.allclose(y, y_ref, atol=1e-3, rtol=1e-3), "mismatch vs jnp.fft.fft"

    print("KERNEL_OK")
</pallas_src>

<mosaic_0001>
module attributes {stable_mosaic.version = 11 : i64} {
  func.func @_fft_kernel(%arg0: i32, %arg1: memref<128x32xf32, #tpu.memory_space<vmem>>, %arg2: memref<32x32xf32, #tpu.memory_space<vmem>>, %arg3: memref<128x32xf32, #tpu.memory_space<vmem>>) attributes {dimension_semantics = [#tpu.dimension_semantics<parallel>], iteration_bounds = array<i64: 1>, scalar_prefetch = 0 : i64, scratch_operands = 0 : i64, tpu.core_type = #tpu.core_type<tc>, window_params = [{transform_indices = @transform_0, window_bounds = array<i64: 128, 32>}, {pipeline_mode = #tpu.pipeline_mode<synchronous>, transform_indices = @transform_1, window_bounds = array<i64: 32, 32>}, {transform_indices = @transform_2, window_bounds = array<i64: 128, 32>}]} {
    %c0 = arith.constant 0 : index
    %c0_0 = arith.constant 0 : index
    %0 = vector.load %arg1[%c0, %c0_0] : memref<128x32xf32, #tpu.memory_space<vmem>>, vector<128x32xf32>
    %c0_1 = arith.constant 0 : index
    %c0_2 = arith.constant 0 : index
    %1 = vector.load %arg2[%c0_1, %c0_2] : memref<32x32xf32, #tpu.memory_space<vmem>>, vector<32x32xf32>
    %cst = arith.constant dense<0.000000e+00> : vector<128x32xf32>
    %2 = tpu.matmul %0, %1, %cst {dimension_numbers = #tpu.dot_dimension_numbers<[1], [0], [0], [1], [0, 0, 1, 1], [], []>} : vector<128x32xf32>, vector<32x32xf32>, vector<128x32xf32> -> vector<128x32xf32>
    %c0_3 = arith.constant 0 : index
    %c0_4 = arith.constant 0 : index
    %3 = vector.load %arg3[%c0_3, %c0_4] : memref<128x32xf32, #tpu.memory_space<vmem>>, vector<128x32xf32>
    tpu.vector_store %arg3[%c0_3, %c0_4], %2 {strides = array<i32>} : memref<128x32xf32, #tpu.memory_space<vmem>>, vector<128x32xf32>,
    return
  }
  func.func @transform_0(%arg0: i32) -> (i32, i32) {
    %c0_i32 = arith.constant 0 : i32
    %c0_i32_0 = arith.constant 0 : i32
    return %arg0, %c0_i32 : i32, i32
  }
  func.func @transform_1(%arg0: i32) -> (i32, i32) {
    %c0_i32 = arith.constant 0 : i32
    %c0_i32_0 = arith.constant 0 : i32
    %c0_i32_1 = arith.constant 0 : i32
    return %c0_i32, %c0_i32_0 : i32, i32
  }
  func.func @transform_2(%arg0: i32) -> (i32, i32) {
    %c0_i32 = arith.constant 0 : i32
    %c0_i32_0 = arith.constant 0 : i32
    return %arg0, %c0_i32 : i32, i32
  }
}

</mosaic_0001>

<llo_original>
// kernel: custom-call.1
$region0: #{custom-call.1}
  %s0 = inlined_call_operand.hbm [shape: c64[2,4,16,16], index: 0, kind: input, shape index: {}]
  %s1 = inlined_call_operand.vmem [shape: f32[2,4,16,16], index: 1, kind: output, shape index: {}]
  %s2 = scalar_lea.hbm %s0, 2048
  $region1: #{custom-call.1} parent=0
    #allocation0 [shape = 's32[1]{0}', space=sflag, size = 0x4, scoped, tag = 'scoped memory for custom-call.1']
    %3 = vsyncpa [#allocation0], 0
    %s4 = sshll.u32 %s1, 4
    %s5 = int_to_ptr.vmem [resolvable:$true] %s4
    %7 = dma.hbm_to_vmem [thread:$0]  %s2, 2048, %s5, [#allocation0]
    %8 = dma.done [#allocation0], 2048
    %9 = vsyncpa [#allocation0], 1

// kernel: custom-call
$region0: #{custom-call}
  %s0 = inlined_call_operand.hbm [shape: c64[2,4,16,16], index: 0, kind: input, shape index: {}]
  %s1 = inlined_call_operand.vmem [shape: f32[2,4,16,16], index: 1, kind: output, shape index: {}]
  $region1: #{custom-call} parent=0
    #allocation0 [shape = 's32[1]{0}', space=sflag, size = 0x4, scoped, tag = 'scoped memory for custom-call']
    %2 = vsyncpa [#allocation0], 0
    %s3 = sshll.u32 %s1, 4
    %s4 = int_to_ptr.vmem [resolvable:$true] %s3
    %6 = dma.hbm_to_vmem [thread:$0]  %s0, 2048, %s4, [#allocation0]
    %7 = dma.done [#allocation0], 2048
    %8 = vsyncpa [#allocation0], 1

// kernel: custom-call.2
$region0: #{custom-call.2}
  %s0 = inlined_call_operand.vmem [shape: f32[2,4,16,16], index: 0, kind: input, shape index: {}]
  %s1 = inlined_call_operand.vmem [shape: f32[2,4,16,16], index: 1, kind: input, shape index: {}]
  %s2 = inlined_call_operand.hbm [shape: c64[2,4,16,16], index: 2, kind: output, shape index: {}]
  %s3 = scalar_lea.hbm %s2, 2048
  $region1: #{custom-call.2} parent=0
    #allocation0 [shape = 's32[1]{0}', space=sflag, size = 0x4, scoped, tag = 'scoped memory for custom-call.2']
    %4 = vsyncpa [#allocation0], 0
    %s5 = sshll.u32 %s0, 4
    %s6 = int_to_ptr.vmem [resolvable:$true] %s5
    %8 = dma.vmem_to_hbm [thread:$0]  %s6, 2048, %s2, [#allocation0]
    %9 = dma.done [#allocation0], 2048
    %10 = vsyncpa [#allocation0], 1
  $region2: #{custom-call.2} parent=0
    #allocation1 [shape = 's32[1]{0}', space=sflag, size = 0x4, scoped, tag = 'scoped memory for custom-call.2']
    %11 = vsyncpa [#allocation1], 0
    %s12 = sshll.u32 %s1, 4
    %s13 = int_to_ptr.vmem [resolvable:$true] %s12
    %15 = dma.vmem_to_hbm [thread:$0]  %s13, 2048, %s3, [#allocation1]
    %16 = dma.done [#allocation1], 2048
    %17 = vsyncpa [#allocation1], 1

// kernel: fft_block.1
$region0: #{fft_block.1}
  #allocation0 [shape = 'u32[]', space=smem, size = 0x4, offset = 0x4, fixed_abs, tag = 'smem constant byte address 0x4 - core index']
  #allocation1 [shape = 'u32[144,128]{1,0:T(1,128)}', space=vmem, size = 0x12000, scoped, tag = 'internal scratch']
  %s0 = inlined_call_operand.vmem [shape: f32[128,32], index: 0, kind: input, shape index: {}]
  %s1 = inlined_call_operand.vmem [shape: f32[32,32], index: 1, kind: input, shape index: {}]
  %s2 = inlined_call_operand.vmem [shape: f32[128,32], index: 2, kind: output, shape index: {}]
  %s3 = sld [smem:[#allocation0]]
  $region18: #{fft_block.1} parent=0
    _
  %s5 = ssub.s32 1, %s3
  %s6 = scalar_select 0, %s5, %s3
  // Predicated region
  $region2: #{fft_block.1} parent=0 // pred_check
    _
  $region3: #{fft_block.1} parent=0 // pred_check_branch
    %8 = sbr.rel (0) target = $region5
  $region4: #{fft_block.1} parent=0 // pred_region
    _
  $region5: #{fft_block.1} parent=0 // pred_fallthru
    _
  // Predicated region
  $region6: #{fft_block.1} parent=0 // pred_check
    _
  $region7: #{fft_block.1} parent=0 // pred_check_branch
    %10 = sbr.rel (0) target = $region9
  $region8: #{fft_block.1} parent=0 // pred_region
    _
  $region9: #{fft_block.1} parent=0 // pred_fallthru
    _
  %v11 = vld [vmem:[%s0] sm:$0xff]
  %v12 = vld [vmem:[%s0 + $0x8] sm:$0xff]
  %v13 = vld [vmem:[%s0 + $0x10] sm:$0xff]
  %v14 = vld [vmem:[%s0 + $0x18] sm:$0xff]
  %v15 = vld [vmem:[%s0 + $0x20] sm:$0xff]
  %v16 = vld [vmem:[%s0 + $0x28] sm:$0xff]
  %v17 = vld [vmem:[%s0 + $0x30] sm:$0xff]
  %v18 = vld [vmem:[%s0 + $0x38] sm:$0xff]
  %v19 = vld [vmem:[%s0 + $0x40] sm:$0xff]
  %v20 = vld [vmem:[%s0 + $0x48] sm:$0xff]
  %v21 = vld [vmem:[%s0 + $0x50] sm:$0xff]
  %v22 = vld [vmem:[%s0 + $0x58] sm:$0xff]
  %v23 = vld [vmem:[%s0 + $0x60] sm:$0xff]
  %v24 = vld [vmem:[%s0 + $0x68] sm:$0xff]
  %v25 = vld [vmem:[%s0 + $0x70] sm:$0xff]
  %v26 = vld [vmem:[%s0 + $0x78] sm:$0xff]
  %v27 = vld [vmem:[%s1] sm:$0xff]
  %v28 = vld [vmem:[%s1 + $0x8] sm:$0xff]
  %v29 = vld [vmem:[%s1 + $0x10] sm:$0xff]
  %v30 = vld [vmem:[%s1 + $0x18] sm:$0xff]
  %vm31 = vcmask 261120
  %v33 = vsel %vm31, %v11, 0
  %v36 = vsel %vm31, %v12, 0
  %v39 = vsel %vm31, %v13, 0
  %v42 = vsel %vm31, %v14, 0
  %v45 = vsel %vm31, %v15, 0
  %v48 = vsel %vm31, %v16, 0
  %v51 = vsel %vm31, %v17, 0
  %v54 = vsel %vm31, %v18, 0
  %v57 = vsel %vm31, %v19, 0
  %v60 = vsel %vm31, %v20, 0
  %v63 = vsel %vm31, %v21, 0
  %v66 = vsel %vm31, %v22, 0
  %v69 = vsel %vm31, %v23, 0
  %v72 = vsel %vm31, %v24, 0
  %v75 = vsel %vm31, %v25, 0
  %v78 = vsel %vm31, %v26, 0
  %80 = vmatprep.subr.mxu0 0.0
  %81 = vmatpush1.msra.mxu0 0.0
  %82 = vmatprep.subr.mxu0 0.0
  %83 = vmatpush1.msra.mxu0 0.0
  %84 = vmatprep.subr.mxu0 0.0
  %85 = vmatpush1.msra.mxu0 0.0
  %86 = vmatprep.subr.mxu0 0.0
  %87 = vmatpush1.msra.mxu0 0.0
  %88 = vmatprep.subr.mxu0 0.0
  %89 = vmatpush1.msra.mxu0 0.0
  %90 = vmatprep.subr.mxu0 0.0
  %91 = vmatpush1.msra.mxu0 0.0
  %92 = vmatprep.subr.mxu0 0.0
  %93 = vmatpush1.msra.mxu0 0.0
  %94 = vmatprep.subr.mxu0 0.0
  %95 = vmatpush1.msra.mxu0 0.0
  %96 = vmatprep.subr.mxu0 0.0
  %97 = vmatpush1.msra.mxu0 0.0
  %98 = vmatprep.subr.mxu0 0.0
  %99 = vmatpush1.msra.mxu0 0.0
  %100 = vmatprep.subr.mxu0 0.0
  %101 = vmatpush1.msra.mxu0 0.0
  %102 = vmatprep.subr.mxu0 0.0
  %103 = vmatpush1.msra.mxu0 0.0
  %104 = vmatprep.subr.mxu0 0.0
  %105 = vmatpush1.msra.mxu0 %v30
  %106 = vmatprep.subr.mxu0 0.0
  %107 = vmatpush1.msra.mxu0 %v29
  %108 = vmatprep.subr.mxu0 0.0
  %109 = vmatpush1.msra.mxu0 %v28
  %110 = vmatprep.subr.mxu0 0.0
  %111 = vmatpush1.msra.mxu0 %v27
  %112 = vmatprep.subr.mxu0 0.0
  %113 = vmatpush2.msra.mxu0 0.0
  %114 = vmatprep.subr.mxu0 0.0
  %115 = vmatpush2.msra.mxu0 0.0
  %116 = vmatprep.subr.mxu0 0.0
  %117 = vmatpush2.msra.mxu0 0.0
  %118 = vmatprep.subr.mxu0 0.0
  %119 = vmatpush2.msra.mxu0 0.0
  %120 = vmatprep.subr.mxu0 0.0
  %121 = vmatpush2.msra.mxu0 0.0
  %122 = vmatprep.subr.mxu0 0.0
  %123 = vmatpush2.msra.mxu0 0.0
  %124 = vmatprep.subr.mxu0 0.0
  %125 = vmatpush2.msra.mxu0 0.0
  %126 = vmatprep.subr.mxu0 0.0
  %127 = vmatpush2.msra.mxu0 0.0
  %128 = vmatprep.subr.mxu0 0.0
  %129 = vmatpush2.msra.mxu0 0.0
  %130 = vmatprep.subr.mxu0 0.0
  %131 = vmatpush2.msra.mxu0 0.0
  %132 = vmatprep.subr.mxu0 0.0
  %133 = vmatpush2.msra.mxu0 0.0
  %134 = vmatprep.subr.mxu0 0.0
  %135 = vmatpush2.msra.mxu0 0.0
  %136 = vmatprep.subr.mxu0 0.0
  %137 = vmatpush2.msra.mxu0 0.0
  %138 = vmatprep.subr.mxu0 0.0
  %139 = vmatpush2.msra.mxu0 0.0
  %140 = vmatprep.subr.mxu0 0.0
  %141 = vmatpush2.msra.mxu0 0.0
  %142 = vmatprep.subr.mxu0 0.0
  %143 = vmatpush2.msra.mxu0 0.0
  %144 = vmatprep.mubr.f32.mxu0 0.0
  %145 = vmatmul.mubr.f32.gmra.mxu0 %v33
  %v146 = vpop.f32.mrf.mxu0
  %v147 = vadd.f32 0.0, %v146
  %v148 = vpop.f32.mrf.mxu0
  %149 = vmatprep.mubr.f32.mxu0 0.0
  %150 = vmatmul.mubr.f32.gmra.mxu0 %v36
  %v151 = vpop.f32.mrf.mxu0
  %v152 = vadd.f32 0.0, %v151
  %v153 = vpop.f32.mrf.mxu0
  %154 = vmatprep.mubr.f32.mxu0 0.0
  %155 = vmatmul.mubr.f32.gmra.mxu0 %v39
  %v156 = vpop.f32.mrf.mxu0
  %v157 = vadd.f32 0.0, %v156
  %v158 = vpop.f32.mrf.mxu0
  %159 = vmatprep.mubr.f32.mxu0 0.0
  %160 = vmatmul.mubr.f32.gmra.mxu0 %v42
  %v161 = vpop.f32.mrf.mxu0
  %v162 = vadd.f32 0.0, %v161
  %v163 = vpop.f32.mrf.mxu0
  %164 = vmatprep.mubr.f32.mxu0 0.0
  %165 = vmatmul.mubr.f32.gmra.mxu0 %v45
  %v166 = vpop.f32.mrf.mxu0
  %v167 = vadd.f32 0.0, %v166
  %v168 = vpop.f32.mrf.mxu0
  %169 = vmatprep.mubr.f32.mxu0 0.0
  %170 = vmatmul.mubr.f32.gmra.mxu0 %v48
  %v171 = vpop.f32.mrf.mxu0
  %v172 = vadd.f32 0.0, %v171
  %v173 = vpop.f32.mrf.mxu0
  %174 = vmatprep.mubr.f32.mxu0 0.0
  %175 = vmatmul.mubr.f32.gmra.mxu0 %v51
  %v176 = vpop.f32.mrf.mxu0
  %v177 = vadd.f32 0.0, %v176
  %v178 = vpop.f32.mrf.mxu0
  %179 = vmatprep.mubr.f32.mxu0 0.0
  %180 = vmatmul.mubr.f32.gmra.mxu0 %v54
  %v181 = vpop.f32.mrf.mxu0
  %v182 = vadd.f32 0.0, %v181
  %v183 = vpop.f32.mrf.mxu0
  %184 = vmatprep.mubr.f32.mxu0 0.0
  %185 = vmatmul.mubr.f32.gmra.mxu0 %v57
  %v186 = vpop.f32.mrf.mxu0
  %v187 = vadd.f32 0.0, %v186
  %v188 = vpop.f32.mrf.mxu0
  %189 = vmatprep.mubr.f32.mxu0 0.0
  %190 = vmatmul.mubr.f32.gmra.mxu0 %v60
  %v191 = vpop.f32.mrf.mxu0
  %v192 = vadd.f32 0.0, %v191
  %v193 = vpop.f32.mrf.mxu0
  %194 = vmatprep.mubr.f32.mxu0 0.0
  %195 = vmatmul.mubr.f32.gmra.mxu0 %v63
  %v196 = vpop.f32.mrf.mxu0
  %v197 = vadd.f32 0.0, %v196
  %v198 = vpop.f32.mrf.mxu0
  %199 = vmatprep.mubr.f32.mxu0 0.0
  %200 = vmatmul.mubr.f32.gmra.mxu0 %v66
  %v201 = vpop.f32.mrf.mxu0
  %v202 = vadd.f32 0.0, %v201
  %v203 = vpop.f32.mrf.mxu0
  %204 = vmatprep.mubr.f32.mxu0 0.0
  %205 = vmatmul.mubr.f32.gmra.mxu0 %v69
  %v206 = vpop.f32.mrf.mxu0
  %v207 = vadd.f32 0.0, %v206
  %v208 = vpop.f32.mrf.mxu0
  %209 = vmatprep.mubr.f32.mxu0 0.0
  %210 = vmatmul.mubr.f32.gmra.mxu0 %v72
  %v211 = vpop.f32.mrf.mxu0
  %v212 = vadd.f32 0.0, %v211
  %v213 = vpop.f32.mrf.mxu0
  %214 = vmatprep.mubr.f32.mxu0 0.0
  %215 = vmatmul.mubr.f32.gmra.mxu0 %v75
  %v216 = vpop.f32.mrf.mxu0
  %v217 = vadd.f32 0.0, %v216
  %v218 = vpop.f32.mrf.mxu0
  %219 = vmatprep.mubr.f32.mxu0 0.0
  %220 = vmatmul.mubr.f32.gmra.mxu0 %v78
  %v221 = vpop.f32.mrf.mxu0
  %v222 = vadd.f32 0.0, %v221
  %v223 = vpop.f32.mrf.mxu0
  %224 = vdwg.mxu0
  %225 = vst.msk [vmem:[%s2] sm:$0xff] %vm31, %v147
  %226 = vst.msk [vmem:[%s2 + $0x8] sm:$0xff] %vm31, %v152
  %227 = vst.msk [vmem:[%s2 + $0x10] sm:$0xff] %vm31, %v157
  %228 = vst.msk [vmem:[%s2 + $0x18] sm:$0xff] %vm31, %v162
  %229 = vst.msk [vmem:[%s2 + $0x20] sm:$0xff] %vm31, %v167
  %230 = vst.msk [vmem:[%s2 + $0x28] sm:$0xff] %vm31, %v172
  %231 = vst.msk [vmem:[%s2 + $0x30] sm:$0xff] %vm31, %v177
  %232 = vst.msk [vmem:[%s2 + $0x38] sm:$0xff] %vm31, %v182
  %233 = vst.msk [vmem:[%s2 + $0x40] sm:$0xff] %vm31, %v187
  %234 = vst.msk [vmem:[%s2 + $0x48] sm:$0xff] %vm31, %v192
  %235 = vst.msk [vmem:[%s2 + $0x50] sm:$0xff] %vm31, %v197
  %236 = vst.msk [vmem:[%s2 + $0x58] sm:$0xff] %vm31, %v202
  %237 = vst.msk [vmem:[%s2 + $0x60] sm:$0xff] %vm31, %v207
  %238 = vst.msk [vmem:[%s2 + $0x68] sm:$0xff] %vm31, %v212
  %239 = vst.msk [vmem:[%s2 + $0x70] sm:$0xff] %vm31, %v217
  %240 = vst.msk [vmem:[%s2 + $0x78] sm:$0xff] %vm31, %v222
  // Predicated region
  $region10: #{fft_block.1} parent=0 // pred_check
    _
  $region11: #{fft_block.1} parent=0 // pred_check_branch
    %242 = sbr.rel (0) target = $region13
  $region12: #{fft_block.1} parent=0 // pred_region
    _
  $region13: #{fft_block.1} parent=0 // pred_fallthru
    _
  // Predicated region
  $region14: #{fft_block.1} parent=0 // pred_check
    _
  $region15: #{fft_block.1} parent=0 // pred_check_branch
    %244 = sbr.rel (0) target = $region17
  $region16: #{fft_block.1} parent=0 // pred_region
    _
  $region17: #{fft_block.1} parent=0 // pred_fallthru
    _

</llo_original>
